<compile_context>
chip_gen: v5e
topology: v5e:2x2
jax: 0.10.0
libtpu: 0.0.40
codegen_flags: <defaults>
</compile_context>

<pallas_src>
import functools
import math

import jax
import jax.numpy as jnp
from jax.experimental import pallas as pl
from jax.experimental.pallas import tpu as pltpu


# ------------------------------ tiling helpers ------------------------------

_WEIGHT_RESIDENT_BYTES = 6 * 1024 * 1024     # keep whole bf16 weight in VMEM
_VMEM_BUDGET = 16 * 1024 * 1024              # conservative per-kernel budget
_DENSE_VMEM_LIMIT = 32 * 1024 * 1024         # scoped limit (ok on v5e/v6e/v7x)


def _round_up(x, m):
    return (x + m - 1) // m * m


def _pick_divisor(n, prefs):
    for t in prefs:
        if n >= t and n % t == 0:
            return t
    return n


def _pick_tiles(M, K, N, *, in_bytes, out_bytes, has_residual=False,
                has_ln_scratch=False, w_rows=None):
    """Pick (tm, tn) for an (M,K)@(K,N) kernel.

    Prefers full-N weight residency when the bf16 weight fits, then the
    largest row tile that (a) gives >=2 blocks on the parallel axis (v7x dual
    TC) and (b) stays inside a conservative VMEM budget.
    """
    w_rows = K if w_rows is None else w_rows
    if w_rows * N * 2 <= _WEIGHT_RESIDENT_BYTES:
        tn = N
        w_bytes = w_rows * N * 2                      # resident, single copy
    else:
        tn = _pick_divisor(N, (512, 256, 128))
        w_bytes = 2 * w_rows * tn * 2                 # double-buffered

    def vmem(tm):
        b = 2 * tm * K * in_bytes + w_bytes + 2 * tm * tn * out_bytes
        if has_residual:
            b += 2 * tm * tn * 4
        if has_ln_scratch:
            b += tm * K * 2
        return b

    for tm in (1024, 512, 384, 256, 192, 128, 96, 64, 48, 32, 24, 16, 8):
        if M % tm == 0 and M // tm >= 2 and vmem(tm) <= _VMEM_BUDGET:
            return tm, tn
    return M, tn                                      # tiny-M fallback


def _dense_params(semantics):
    return pltpu.CompilerParams(dimension_semantics=semantics,
                                vmem_limit_bytes=_DENSE_VMEM_LIMIT)


# ----------------------------- dense Pallas kernels -------------------------

def _ln_matmul_kernel(x_ref, g_ref, b_ref, w_ref, o_ref, xn_ref):
    # LN(x) is computed once per row tile (j == 0), cached in VMEM (bf16), and
    # reused for every N tile.  LN stats in f32, matmul in bf16 / f32 acc.
    @pl.when(pl.program_id(1) == 0)
    def _ln():
        x = x_ref[...].astype(jnp.float32)
        mu = jnp.mean(x, axis=-1, keepdims=True)
        var = jnp.mean(jnp.square(x - mu), axis=-1, keepdims=True)
        xn = (x - mu) * jax.lax.rsqrt(var + 1e-5)
        xn_ref[...] = (xn * g_ref[...] + b_ref[...]).astype(jnp.bfloat16)

    o_ref[...] = jnp.dot(xn_ref[...], w_ref[...],
                         preferred_element_type=jnp.float32).astype(o_ref.dtype)


def ln_matmul(x, gamma, beta, w_bf16, out_dtype=jnp.bfloat16):
    M, D = x.shape
    N = w_bf16.shape[1]
    tm, tn = _pick_tiles(M, D, N,
                         in_bytes=x.dtype.itemsize,
                         out_bytes=jnp.dtype(out_dtype).itemsize,
                         has_ln_scratch=True)
    return pl.pallas_call(
        _ln_matmul_kernel,
        out_shape=jax.ShapeDtypeStruct((M, N), out_dtype),
        grid=(M // tm, N // tn),
        in_specs=[pl.BlockSpec((tm, D), lambda i, j: (i, 0)),
                  pl.BlockSpec((1, D), lambda i, j: (0, 0)),
                  pl.BlockSpec((1, D), lambda i, j: (0, 0)),
                  pl.BlockSpec((D, tn), lambda i, j: (0, j))],
        out_specs=pl.BlockSpec((tm, tn), lambda i, j: (i, j)),
        scratch_shapes=[pltpu.VMEM((tm, D), jnp.bfloat16)],
        compiler_params=_dense_params(("parallel", "arbitrary")),
    )(x, gamma.reshape(1, D), beta.reshape(1, D), w_bf16)


def _matmul_res_kernel(x_ref, w_ref, r_ref, o_ref):
    # One (tm, tn) tile of  residual + x @ W  (x, W already bf16; res/out f32).
    o_ref[...] = r_ref[...] + jnp.dot(x_ref[...], w_ref[...],
                                      preferred_element_type=jnp.float32)


def matmul_residual(x, w_bf16, res):
    M, K = x.shape
    N = w_bf16.shape[1]
    tm, tn = _pick_tiles(M, K, N, in_bytes=x.dtype.itemsize, out_bytes=4,
                         has_residual=True)
    return pl.pallas_call(
        _matmul_res_kernel,
        out_shape=jax.ShapeDtypeStruct((M, N), jnp.float32),
        grid=(M // tm, N // tn),
        in_specs=[pl.BlockSpec((tm, K), lambda i, j: (i, 0)),
                  pl.BlockSpec((K, tn), lambda i, j: (0, j)),
                  pl.BlockSpec((tm, tn), lambda i, j: (i, j))],
        out_specs=pl.BlockSpec((tm, tn), lambda i, j: (i, j)),
        compiler_params=_dense_params(("parallel", "parallel")),
    )(x, w_bf16, res)


def _swiglu_res_kernel(u_ref, w_ref, r_ref, o_ref):
    # One (tm, tn) tile of  residual + swiglu(u) @ W.  SiLU kept in f32.
    u = u_ref[...]
    hidden = u.shape[-1] // 2
    a = u[:, :hidden].astype(jnp.float32)
    g = u[:, hidden:].astype(jnp.float32)
    act = (a * (g * jax.nn.sigmoid(g))).astype(jnp.bfloat16)
    o_ref[...] = r_ref[...] + jnp.dot(act, w_ref[...],
                                      preferred_element_type=jnp.float32)


def swiglu_matmul_residual(u, w_bf16, res):
    M, K2 = u.shape
    Kh, N = w_bf16.shape
    tm, tn = _pick_tiles(M, K2, N, in_bytes=u.dtype.itemsize, out_bytes=4,
                         has_residual=True, w_rows=Kh)
    return pl.pallas_call(
        _swiglu_res_kernel,
        out_shape=jax.ShapeDtypeStruct((M, N), jnp.float32),
        grid=(M // tm, N // tn),
        in_specs=[pl.BlockSpec((tm, K2), lambda i, j: (i, 0)),
                  pl.BlockSpec((Kh, tn), lambda i, j: (0, j)),
                  pl.BlockSpec((tm, tn), lambda i, j: (i, j))],
        out_specs=pl.BlockSpec((tm, tn), lambda i, j: (i, j)),
        compiler_params=_dense_params(("parallel", "parallel")),
    )(u, w_bf16, res)


# --------------------------- flash attention kernel -------------------------

def apply_rope(x, cos, sin):
    # x: (B, H, S, hd), cos/sin: (S, rh); rotary on the first 2*rh head dims
    # (flash_attn convention); remaining head dims pass through untouched.
    rh = cos.shape[-1]
    c = cos[None, None]
    s = sin[None, None]
    x1 = x[..., :rh]
    x2 = x[..., rh:2 * rh]
    rest = x[..., 2 * rh:]
    return jnp.concatenate([x1 * c - x2 * s, x2 * c + x1 * s, rest], axis=-1)


def _flash_attn_kernel(q_ref, k_ref, v_ref, o_ref, m_sc, l_sc, acc_sc, *,
                       tq, tk):
    qi = pl.program_id(2)
    ki = pl.program_id(3)
    nk = pl.num_programs(3)

    # Last kv tile that intersects the causal region of this q tile.
    last_k = jnp.minimum(nk - 1, (qi * tq + tq - 1) // tk)

    @pl.when(ki == 0)
    def _init():
        m_sc[...] = jnp.full(m_sc.shape, -jnp.inf, dtype=jnp.float32)
        l_sc[...] = jnp.zeros(l_sc.shape, dtype=jnp.float32)
        acc_sc[...] = jnp.zeros(acc_sc.shape, dtype=jnp.float32)

    @pl.when(ki <= last_k)                    # skip tiles above the diagonal
    def _step():
        # q/k already have RoPE + softmax scale applied (once, outside the
        # kernel); everything here is bf16 matmuls with f32 softmax math.
        q = q_ref[0, 0]
        k = k_ref[0, 0]
        s = jax.lax.dot_general(q, k, (((1,), (1,)), ((), ())),
                                preferred_element_type=jnp.float32)
        q_pos = qi * tq + jax.lax.broadcasted_iota(jnp.int32, (tq, 1), 0)
        k_pos = ki * tk + jax.lax.broadcasted_iota(jnp.int32, (1, tk), 1)
        s = jnp.where(k_pos <= q_pos, s, -1e30)

        m_prev = m_sc[...]
        m_new = jnp.maximum(m_prev, jnp.max(s, axis=-1, keepdims=True))
        alpha = jnp.exp(m_prev - m_new)
        p = jnp.exp(s - m_new)
        l_sc[...] = alpha * l_sc[...] + jnp.sum(p, axis=-1, keepdims=True)
        acc_sc[...] = alpha * acc_sc[...] + jnp.dot(
            p.astype(jnp.bfloat16), v_ref[0, 0],
            preferred_element_type=jnp.float32)
        m_sc[...] = m_new

    @pl.when(ki == last_k)
    def _finalize():
        o_ref[0, 0] = (acc_sc[...] *
                       pl.reciprocal(l_sc[...], approx=True)).astype(o_ref.dtype)


def flash_attention(q, k, v):
    # q, k, v: (B, H, S_pad, hd) bf16; RoPE + 1/sqrt(hd) already folded into q/k.
    B, H, S_pad, hd = q.shape
    tq = _pick_divisor(S_pad, (256, 128))
    tk = tq
    nk = S_pad // tk

    def q_map(b, h, i, j):
        return (b, h, i, 0)

    def kv_map(b, h, i, j):
        # Clamp to the causal diagonal so above-diagonal K/V tiles reuse the
        # previous block and are never DMA'd (compute already gated by pl.when).
        last = jnp.minimum((i * tq + tq - 1) // tk, nk - 1)
        return (b, h, jnp.minimum(j, last), 0)

    kernel = functools.partial(_flash_attn_kernel, tq=tq, tk=tk)
    return pl.pallas_call(
        kernel,
        out_shape=jax.ShapeDtypeStruct((B, H, S_pad, hd), jnp.bfloat16),
        grid=(B, H, S_pad // tq, nk),
        in_specs=[pl.BlockSpec((1, 1, tq, hd), q_map),
                  pl.BlockSpec((1, 1, tk, hd), kv_map),
                  pl.BlockSpec((1, 1, tk, hd), kv_map)],
        out_specs=pl.BlockSpec((1, 1, tq, hd), q_map),
        scratch_shapes=[pltpu.VMEM((tq, 1), jnp.float32),
                        pltpu.VMEM((tq, 1), jnp.float32),
                        pltpu.VMEM((tq, hd), jnp.float32)],
        compiler_params=pltpu.CompilerParams(
            dimension_semantics=("parallel", "parallel", "parallel",
                                 "arbitrary")),
    )(q, k, v)


# --------------------------------- forward ----------------------------------

def transformer_forward(params, x_tokens, y_labels):
    cfg = params['config']
    D, H, hd = cfg['dim'], cfg['n_heads'], cfg['head_dim']
    sm_scale = 1.0 / math.sqrt(hd)
    B, S_img = x_tokens.shape
    S = S_img + 1
    # Pad the sequence ONCE to an (8,128)-friendly length; padded rows are
    # sliced off at the end (causal mask keeps real rows from seeing padding).
    S_pad = _round_up(S, 128) if S > 128 else _round_up(S, 8)
    M = B * S_pad

    # Pre-cast all matmul weights to bf16 once (not per tile inside kernels).
    blocks = [{**blk,
               'qkv_w': blk['qkv_w'].astype(jnp.bfloat16),
               'attn_out_w': blk['attn_out_w'].astype(jnp.bfloat16),
               'up_w': blk['up_w'].astype(jnp.bfloat16),
               'down_w': blk['down_w'].astype(jnp.bfloat16)}
              for blk in params['blocks']]
    out_proj_w = params['out_proj_w'].astype(jnp.bfloat16)

    xe = jnp.take(params['image_embed'], x_tokens, axis=0)      # (B, S_img, D)
    ye = jnp.take(params['class_embed'], y_labels, axis=0)      # (B, D)
    h = jnp.concatenate([ye[:, None, :], xe], axis=1)           # (B, S, D)
    h = jnp.pad(h, ((0, 0), (0, S_pad - S), (0, 0)))            # (B, S_pad, D)

    cos = jnp.pad(params['cos'][:S], ((0, S_pad - S), (0, 0)),
                  constant_values=1.0)
    sin = jnp.pad(params['sin'][:S], ((0, S_pad - S), (0, 0)),
                  constant_values=0.0)

    for blk in blocks:
        # --- self attention: LN+qkv (bf16), RoPE+scale fused into the head
        #     split, flash attention, out-proj with fused residual -----------
        hf = h.reshape(M, D)
        qkv = ln_matmul(hf, blk['attn_ln_g'], blk['attn_ln_b'], blk['qkv_w'])
        qkv = qkv.reshape(B, S_pad, 3, H, hd)
        qkv = jnp.transpose(qkv, (2, 0, 3, 1, 4))               # (3,B,H,S,hd)
        q = (apply_rope(qkv[0], cos, sin) * sm_scale).astype(jnp.bfloat16)
        k = apply_rope(qkv[1], cos, sin).astype(jnp.bfloat16)
        v = qkv[2]
        a = flash_attention(q, k, v)                            # bf16
        a = jnp.transpose(a, (0, 2, 1, 3)).reshape(M, D)
        h = matmul_residual(a, blk['attn_out_w'], hf).reshape(B, S_pad, D)

        # --- feed forward: LN+up (bf16), swiglu+down with fused residual ----
        hf = h.reshape(M, D)
        u = ln_matmul(hf, blk['ff_ln_g'], blk['ff_ln_b'], blk['up_w'])
        h = swiglu_matmul_residual(u, blk['down_w'], hf).reshape(B, S_pad, D)

    hf = h.reshape(M, D)
    logits = ln_matmul(hf, params['out_ln_g'], params['out_ln_b'], out_proj_w,
                       out_dtype=jnp.float32)
    return logits.reshape(B, S_pad, -1)[:, :S, :]


# --------------------------- pure-JAX reference ------------------------------

def _ln_ref(x, g, b):
    mu = jnp.mean(x, axis=-1, keepdims=True)
    var = jnp.mean(jnp.square(x - mu), axis=-1, keepdims=True)
    return (x - mu) * jax.lax.rsqrt(var + 1e-5) * g + b


def ref_forward(params, x_tokens, y_labels):
    cfg = params['config']
    D, H, hd, Hd = cfg['dim'], cfg['n_heads'], cfg['head_dim'], cfg['hidden_dim']
    B, S_img = x_tokens.shape
    S = S_img + 1
    xe = jnp.take(params['image_embed'], x_tokens, axis=0)
    ye = jnp.take(params['class_embed'], y_labels, axis=0)
    h = jnp.concatenate([ye[:, None, :], xe], axis=1)
    cos, sin = params['cos'][:S], params['sin'][:S]
    mask = jnp.tril(jnp.ones((S, S), dtype=bool))
    for blk in params['blocks']:
        xn = _ln_ref(h, blk['attn_ln_g'], blk['attn_ln_b'])
        qkv = (xn @ blk['qkv_w']).reshape(B, S, 3, H, hd)
        q = apply_rope(jnp.transpose(qkv[:, :, 0], (0, 2, 1, 3)), cos, sin)
        k = apply_rope(jnp.transpose(qkv[:, :, 1], (0, 2, 1, 3)), cos, sin)
        v = jnp.transpose(qkv[:, :, 2], (0, 2, 1, 3))
        s = jnp.einsum('bhqd,bhkd->bhqk', q, k) / math.sqrt(hd)
        s = jnp.where(mask, s, -1e30)
        p = jax.nn.softmax(s, axis=-1)
        a = jnp.einsum('bhqk,bhkd->bhqd', p, v)
        a = jnp.transpose(a, (0, 2, 1, 3)).reshape(B, S, D)
        h = h + a @ blk['attn_out_w']
        xn = _ln_ref(h, blk['ff_ln_g'], blk['ff_ln_b'])
        u = xn @ blk['up_w']
        h = h + (u[..., :Hd] * jax.nn.silu(u[..., Hd:])) @ blk['down_w']
    xn = _ln_ref(h, params['out_ln_g'], params['out_ln_b'])
    return xn @ params['out_proj_w']


# ------------------------------- parameters ---------------------------------

def init_params(key, *, depth, dim, hidden_dim, head_dim, vocab_size):
    n_heads = dim // head_dim

    def nrm(k, shape, scale):
        return scale * jax.random.normal(k, shape, dtype=jnp.float32)

    keys = iter(jax.random.split(key, 4 + 4 * depth))
    params = {
        'config': dict(dim=dim, hidden_dim=hidden_dim, head_dim=head_dim,
                       n_heads=n_heads, vocab_size=vocab_size, depth=depth),
        'class_embed': nrm(next(keys), (10, dim), 1.0),
        'image_embed': nrm(next(keys), (vocab_size, dim), 1.0),
        'out_ln_g': jnp.ones((dim,), jnp.float32),
        'out_ln_b': jnp.zeros((dim,), jnp.float32),
        # zero_init in the original module; small random here so the kernels
        # compute something non-trivial (shapes/semantics unchanged).
        'out_proj_w': nrm(next(keys), (dim, vocab_size), 0.02),
        'blocks': [],
    }
    for _ in range(depth):
        params['blocks'].append({
            'attn_ln_g': jnp.ones((dim,), jnp.float32),
            'attn_ln_b': jnp.zeros((dim,), jnp.float32),
            'qkv_w': nrm(next(keys), (dim, 3 * dim), dim ** -0.5),
            'attn_out_w': nrm(next(keys), (dim, dim), 0.02),       # zero_init
            'ff_ln_g': jnp.ones((dim,), jnp.float32),
            'ff_ln_b': jnp.zeros((dim,), jnp.float32),
            'up_w': nrm(next(keys), (dim, 2 * hidden_dim), dim ** -0.5),
            'down_w': nrm(next(keys), (hidden_dim, dim), 0.02),    # zero_init
        })

    # rotary tables: matches SelfAttention.__init__ (make_axial_pos(32, 32)
    # with a zero position prepended for the class token).
    log_min, log_max = math.log(math.pi), math.log(10 * math.pi)
    freqs = jnp.exp(jnp.linspace(log_min, log_max, head_dim // 8 + 1)[:-1])
    h_pos = jnp.linspace(-1.0, 1.0, 33)
    h_pos = (h_pos[:-1] + h_pos[1:]) / 2
    w_pos = jnp.linspace(-1.0, 1.0, 33)
    w_pos = (w_pos[:-1] + w_pos[1:]) / 2
    gh, gw = jnp.meshgrid(h_pos, w_pos, indexing='ij')
    pos = jnp.stack([gh, gw], axis=-1).reshape(32 * 32, 2)
    pos = jnp.concatenate([jnp.zeros((1, 2)), pos], axis=0)        # (1025, 2)
    theta = jnp.concatenate([pos[:, 0:1] * freqs, pos[:, 1:2] * freqs], axis=-1)
    params['cos'] = jnp.cos(theta).astype(jnp.float32)
    params['sin'] = jnp.sin(theta).astype(jnp.float32)
    return params


# ---------------------------------- main -------------------------------------

if __name__ == "__main__":
    depth, dim, hidden_dim, head_dim, vocab_size = 2, 64, 128, 32, 256
    B, S_img = 2, 16

    key = jax.random.PRNGKey(0)
    kp, kx, ky = jax.random.split(key, 3)
    params = init_params(kp, depth=depth, dim=dim, hidden_dim=hidden_dim,
                         head_dim=head_dim, vocab_size=vocab_size)
    x_tokens = jax.random.randint(kx, (B, S_img), 0, vocab_size, dtype=jnp.int32)
    y_labels = jax.random.randint(ky, (B,), 0, 10, dtype=jnp.int32)

    out = transformer_forward(params, x_tokens, y_labels)
    out = jax.block_until_ready(out)

    ref = jax.block_until_ready(ref_forward(params, x_tokens, y_labels))
    assert out.shape == (B, S_img + 1, vocab_size)
    assert bool(jnp.all(jnp.isfinite(out)))
    max_err = float(jnp.max(jnp.abs(out - ref)))
    assert max_err < 5e-2, f"mismatch vs reference: {max_err}"

    print("KERNEL_OK")
</pallas_src>

<mosaic_0001>
module attributes {stable_mosaic.version = 11 : i64} {
  func.func @_ln_matmul_kernel(%arg0: i32, %arg1: i32, %arg2: memref<24x64xf32, #tpu.memory_space<vmem>>, %arg3: memref<1x64xf32, #tpu.memory_space<vmem>>, %arg4: memref<1x64xf32, #tpu.memory_space<vmem>>, %arg5: memref<64x192xbf16, #tpu.memory_space<vmem>>, %arg6: memref<24x192xbf16, #tpu.memory_space<vmem>>, %arg7: memref<24x64xbf16, #tpu.memory_space<vmem>>) attributes {dimension_semantics = [#tpu.dimension_semantics<parallel>, #tpu.dimension_semantics<arbitrary>], iteration_bounds = array<i64: 2, 1>, scalar_prefetch = 0 : i64, scratch_operands = 1 : i64, tpu.core_type = #tpu.core_type<tc>, window_params = [{transform_indices = @transform_0, window_bounds = array<i64: 24, 64>}, {pipeline_mode = #tpu.pipeline_mode<synchronous>, transform_indices = @transform_1, window_bounds = array<i64: 1, 64>}, {pipeline_mode = #tpu.pipeline_mode<synchronous>, transform_indices = @transform_2, window_bounds = array<i64: 1, 64>}, {transform_indices = @transform_3, window_bounds = array<i64: 64, 192>}, {transform_indices = @transform_4, window_bounds = array<i64: 24, 192>}]} {
    %c0_i32 = arith.constant 0 : i32
    %0 = arith.cmpi eq, %arg1, %c0_i32 : i32
    %1 = arith.extui %0 : i1 to i32
    %c0_i32_0 = arith.constant 0 : i32
    %2 = arith.cmpi ne, %1, %c0_i32_0 : i32
    scf.if %2 {
      %c0_6 = arith.constant 0 : index
      %c0_7 = arith.constant 0 : index
      %8 = vector.load %arg2[%c0_6, %c0_7] : memref<24x64xf32, #tpu.memory_space<vmem>>, vector<24x64xf32>
      %cst_8 = arith.constant dense<0.000000e+00> : vector<24xf32>
      %9 = vector.multi_reduction <add>, %8, %cst_8 [1] : vector<24x64xf32> to vector<24xf32>
      %10 = vector.shape_cast %9 : vector<24xf32> to vector<24x1xf32>
      %cst_9 = arith.constant 6.400000e+01 : f32
      %11 = vector.broadcast %cst_9 : f32 to vector<24x1xf32>
      %12 = arith.divf %10, %11 : vector<24x1xf32>
      %13 = vector.broadcast %12 : vector<24x1xf32> to vector<24x64xf32>
      %14 = arith.subf %8, %13 : vector<24x64xf32>
      %15 = arith.mulf %14, %14 : vector<24x64xf32>
      %cst_10 = arith.constant dense<0.000000e+00> : vector<24xf32>
      %16 = vector.multi_reduction <add>, %15, %cst_10 [1] : vector<24x64xf32> to vector<24xf32>
      %17 = vector.shape_cast %16 : vector<24xf32> to vector<24x1xf32>
      %cst_11 = arith.constant 6.400000e+01 : f32
      %18 = vector.broadcast %cst_11 : f32 to vector<24x1xf32>
      %19 = arith.divf %17, %18 : vector<24x1xf32>
      %20 = vector.broadcast %12 : vector<24x1xf32> to vector<24x64xf32>
      %21 = arith.subf %8, %20 : vector<24x64xf32>
      %cst_12 = arith.constant 9.99999974E-6 : f32
      %22 = vector.broadcast %cst_12 : f32 to vector<24x1xf32>
      %23 = arith.addf %19, %22 : vector<24x1xf32>
      %24 = math.rsqrt %23 : vector<24x1xf32>
      %25 = vector.broadcast %24 : vector<24x1xf32> to vector<24x64xf32>
      %26 = arith.mulf %21, %25 : vector<24x64xf32>
      %c0_13 = arith.constant 0 : index
      %c0_14 = arith.constant 0 : index
      %27 = vector.load %arg3[%c0_13, %c0_14] : memref<1x64xf32, #tpu.memory_space<vmem>>, vector<1x64xf32>
      %28 = vector.broadcast %27 : vector<1x64xf32> to vector<24x64xf32>
      %29 = arith.mulf %26, %28 : vector<24x64xf32>
      %c0_15 = arith.constant 0 : index
      %c0_16 = arith.constant 0 : index
      %30 = vector.load %arg4[%c0_15, %c0_16] : memref<1x64xf32, #tpu.memory_space<vmem>>, vector<1x64xf32>
      %31 = vector.broadcast %30 : vector<1x64xf32> to vector<24x64xf32>
      %32 = arith.addf %29, %31 : vector<24x64xf32>
      %33 = arith.truncf %32 : vector<24x64xf32> to vector<24x64xbf16>
      %c0_17 = arith.constant 0 : index
      %c0_18 = arith.constant 0 : index
      %34 = vector.load %arg7[%c0_17, %c0_18] : memref<24x64xbf16, #tpu.memory_space<vmem>>, vector<24x64xbf16>
      tpu.vector_store %arg7[%c0_17, %c0_18], %33 {strides = array<i32>} : memref<24x64xbf16, #tpu.memory_space<vmem>>, vector<24x64xbf16>,
    } else {
    }
    %c0 = arith.constant 0 : index
    %c0_1 = arith.constant 0 : index
    %3 = vector.load %arg7[%c0, %c0_1] : memref<24x64xbf16, #tpu.memory_space<vmem>>, vector<24x64xbf16>
    %c0_2 = arith.constant 0 : index
    %c0_3 = arith.constant 0 : index
    %4 = vector.load %arg5[%c0_2, %c0_3] : memref<64x192xbf16, #tpu.memory_space<vmem>>, vector<64x192xbf16>
    %cst = arith.constant dense<0.000000e+00> : vector<24x192xf32>
    %5 = tpu.matmul %3, %4, %cst {dimension_numbers = #tpu.dot_dimension_numbers<[1], [0], [0], [1], [0, 0, 1, 1], [], []>} : vector<24x64xbf16>, vector<64x192xbf16>, vector<24x192xf32> -> vector<24x192xf32>
    %6 = arith.truncf %5 : vector<24x192xf32> to vector<24x192xbf16>
    %c0_4 = arith.constant 0 : index
    %c0_5 = arith.constant 0 : index
    %7 = vector.load %arg6[%c0_4, %c0_5] : memref<24x192xbf16, #tpu.memory_space<vmem>>, vector<24x192xbf16>
    tpu.vector_store %arg6[%c0_4, %c0_5], %6 {strides = array<i32>} : memref<24x192xbf16, #tpu.memory_space<vmem>>, vector<24x192xbf16>,
    return
  }
  func.func @transform_0(%arg0: i32, %arg1: i32) -> (i32, i32) {
    %c0_i32 = arith.constant 0 : i32
    %c0_i32_0 = arith.constant 0 : i32
    return %arg0, %c0_i32 : i32, i32
  }
  func.func @transform_1(%arg0: i32, %arg1: i32) -> (i32, i32) {
    %c0_i32 = arith.constant 0 : i32
    %c0_i32_0 = arith.constant 0 : i32
    %c0_i32_1 = arith.constant 0 : i32
    return %c0_i32, %c0_i32_0 : i32, i32
  }
  func.func @transform_2(%arg0: i32, %arg1: i32) -> (i32, i32) {
    %c0_i32 = arith.constant 0 : i32
    %c0_i32_0 = arith.constant 0 : i32
    %c0_i32_1 = arith.constant 0 : i32
    return %c0_i32, %c0_i32_0 : i32, i32
  }
  func.func @transform_3(%arg0: i32, %arg1: i32) -> (i32, i32) {
    %c0_i32 = arith.constant 0 : i32
    %c0_i32_0 = arith.constant 0 : i32
    return %c0_i32, %arg1 : i32, i32
  }
  func.func @transform_4(%arg0: i32, %arg1: i32) -> (i32, i32) {
    %c0_i32 = arith.constant 0 : i32
    return %arg0, %arg1 : i32, i32
  }
}

</mosaic_0001>

<llo_original>
// kernel: tpu_custom_call.1
$region0: #{tpu_custom_call.1}
  #allocation0 [shape = 'u32[]', space=smem, size = 0x4, offset = 0x4, fixed_abs, tag = 'smem constant byte address 0x4 - core index']
  #allocation1 [shape = 'u32[72,128]{1,0:T(1,128)}', space=vmem, size = 0x9000, scoped, tag = 'internal scratch']
  #allocation2 [shape = 'bf16[24,64]{1,0:T(8,128)(2,1)}', space=vmem, size = 0x1800, scoped, tag = 'scratch operand']
  %s0 = inlined_call_operand.hbm [shape: f32[48,64], index: 0, kind: input, shape index: {}]
  %s1 = inlined_call_operand.hbm [shape: f32[1,64], index: 1, kind: input, shape index: {}]
  %s2 = inlined_call_operand.vmem [shape: f32[1,64], index: 2, kind: input, shape index: {}]
  %s3 = inlined_call_operand.hbm [shape: bf16[64,192], index: 3, kind: input, shape index: {}]
  %s4 = inlined_call_operand.hbm [shape: bf16[48,192], index: 4, kind: output, shape index: {}]
  %s5 = sld [smem:[#allocation0]]
  $region65: #{tpu_custom_call.1} parent=0
    _
  %s7 = ssub.s32 1, %s5
  %s8 = scalar_select 0, %s7, %s5
  $region1: #{tpu_custom_call.1} parent=0
    #allocation3 [shape = 'u8[24576]{0}', space=vmem, size = 0x6000, scoped, tag = 'input window, operand 0']
    #allocation4 [shape = 's32[2]{0}', space=sflag, size = 0x8, scoped, tag = 'scoped memory for tpu_custom_call.1']
    #allocation5 [shape = 's32[2]{0}', space=sflag, size = 0x8, scoped, tag = 'scoped memory for tpu_custom_call.1']
    #allocation6 [shape = 'u8[512]{0}', space=vmem, size = 0x400, scoped, tag = 'input window, operand 1, single buffered']
    #allocation7 [shape = 's32[1]{0}', space=sflag, size = 0x4, scoped, tag = 'scoped memory for tpu_custom_call.1']
    #allocation8 [shape = 'u8[32768]{0}', space=vmem, size = 0x8000, scoped, tag = 'input window, operand 3, single buffered']
    #allocation9 [shape = 'u8[24576]{0}', space=vmem, size = 0x6000, scoped, tag = 'output window, operand 0']
    %9 = vsyncpa [#allocation4], 0
    %s10 = scalar_lea.sflag [#allocation4], 1
    %11 = vsyncpa %s10, 0
    %12 = vsyncpa [#allocation7], 0
    %13 = vsyncpa [#allocation5], 0
    %s14 = scalar_lea.sflag [#allocation5], 1
    %15 = vsyncpa %s14, 0
    loop: start=0, step=1, limit=4
    $region2: #{tpu_custom_call.1} parent=1 // loop_pre_header
      _
    $region3: #{tpu_custom_call.1} parent=1 // loop_header
      %s17 = sphi 0, %s21
      %p18 = scmp.ge.s32.totalorder %s17, 4
      %s24 = sphi 0, %s36
      %s25 = sphi 0, %s32
      %s26 = sphi 0, %s24
      %s27 = sphi 0, %s25
      %s28 = sphi 0, %s26
      %s29 = sphi 0, %s27
      %s39 = sphi 0, %s41
      %s42 = sphi 0, %s39
      %s43 = sphi 0, %s42
      %s59 = sphi 0, %s43
      %s63 = sphi 0, %s63
      %s65 = sphi 0, %s63
      %s66 = sphi 0, %s65
      %s80 = sphi 0, %s66
      %s84 = sphi 0, %s84
      %s86 = sphi 0, %s84
      %s87 = sphi 0, %s86
      %s101 = sphi 0, %s87
      %s107 = sphi 0, %s109
      %s110 = sphi 0, %s107
      %s111 = sphi 0, %s110
      %s127 = sphi 0, %s111
      %s135 = sphi 0, %s137
      %s138 = sphi 0, %s135
      %s139 = sphi 0, %s138
      %s155 = sphi 0, %s139
    $region4: #{tpu_custom_call.1} parent=1 // loop_header_branch
      %20 = sbr.rel (%p18) target = $region8
    $region5: #{tpu_custom_call.1} parent=1 // loop_body
      %s22 = ssub.s32 %s17, 1
      %s23 = ssub.s32 %s17, 2
      %s30 = sadd.s32 1, %s25
      %p31 = scmp.ge.s32.totalorder %s30, 1
      %s32 = scalar_select %p31, 0, %s30
      %s33 = sadd.s32 1, %s24
      %s34 = scalar_select %p31, %s33, %s24
      %p35 = scmp.ge.s32.totalorder %s34, 2
      %s36 = scalar_select %p35, 0, %s34
      %s37 = ssub.s32 %s24, %s36
      %p38 = scmp.eq.s32.totalorder %s37, 0
      %s40 = sadd.s32 %s39, 1
      %s41 = scalar_select %p38, %s39, %s40
      %p44 = pneg %p38
      %p45 = scmp.eq.s32.totalorder %s17, 1
      %p46 = por %p44, %p45
      %p47 = scmp.ne.s32.totalorder %s39, %s42
      %p48 = scmp.eq.s32.totalorder %s17, 0
      %p49 = por %p47, %p48
      %p50 = scmp.ne.s32.totalorder %s39, %s42
      %p51 = scmp.eq.s32.totalorder %s22, 1
      %p52 = por %p50, %p51
      %p53 = scmp.ne.s32.totalorder %s42, %s43
      %p54 = scmp.eq.s32.totalorder %s22, 0
      %p55 = por %p53, %p54
      %p56 = scmp.ne.s32.totalorder %s42, %s43
      %p57 = scmp.eq.s32.totalorder %s23, 1
      %p58 = por %p56, %p57
      %p60 = scmp.ne.s32.totalorder %s43, %s59
      %p61 = scmp.eq.s32.totalorder %s23, 0
      %p62 = por %p60, %p61
      %s64 = sadd.s32 %s63, 1
      %p67 = scmp.eq.s32.totalorder %s17, 1
      %p68 = scmp.ne.s32.totalorder %s63, %s65
      %p69 = scmp.eq.s32.totalorder %s17, 0
      %p70 = por %p68, %p69
      %p71 = scmp.ne.s32.totalorder %s63, %s65
      %p72 = scmp.eq.s32.totalorder %s22, 1
      %p73 = por %p71, %p72
      %p74 = scmp.ne.s32.totalorder %s65, %s66
      %p75 = scmp.eq.s32.totalorder %s22, 0
      %p76 = por %p74, %p75
      %p77 = scmp.ne.s32.totalorder %s65, %s66
      %p78 = scmp.eq.s32.totalorder %s23, 1
      %p79 = por %p77, %p78
      %p81 = scmp.ne.s32.totalorder %s66, %s80
      %p82 = scmp.eq.s32.totalorder %s23, 0
      %p83 = por %p81, %p82
      %s85 = sadd.s32 %s84, 1
      %p88 = scmp.eq.s32.totalorder %s17, 1
      %p89 = scmp.ne.s32.totalorder %s84, %s86
      %p90 = scmp.eq.s32.totalorder %s17, 0
      %p91 = por %p89, %p90
      %p92 = scmp.ne.s32.totalorder %s84, %s86
      %p93 = scmp.eq.s32.totalorder %s22, 1
      %p94 = por %p92, %p93
      %p95 = scmp.ne.s32.totalorder %s86, %s87
      %p96 = scmp.eq.s32.totalorder %s22, 0
      %p97 = por %p95, %p96
      %p98 = scmp.ne.s32.totalorder %s86, %s87
      %p99 = scmp.eq.s32.totalorder %s23, 1
      %p100 = por %p98, %p99
      %p102 = scmp.ne.s32.totalorder %s87, %s101
      %p103 = scmp.eq.s32.totalorder %s23, 0
      %p104 = por %p102, %p103
      %s105 = ssub.s32 %s25, %s32
      %p106 = scmp.eq.s32.totalorder %s105, 0
      %s108 = sadd.s32 %s107, 1
      %s109 = scalar_select %p106, %s107, %s108
      %p112 = pneg %p106
      %p113 = scmp.eq.s32.totalorder %s17, 1
      %p114 = por %p112, %p113
      %p115 = scmp.ne.s32.totalorder %s107, %s110
      %p116 = scmp.eq.s32.totalorder %s17, 0
      %p117 = por %p115, %p116
      %p118 = scmp.ne.s32.totalorder %s107, %s110
      %p119 = scmp.eq.s32.totalorder %s22, 1
      %p120 = por %p118, %p119
      %p121 = scmp.ne.s32.totalorder %s110, %s111
      %p122 = scmp.eq.s32.totalorder %s22, 0
      %p123 = por %p121, %p122
      %p124 = scmp.ne.s32.totalorder %s110, %s111
      %p125 = scmp.eq.s32.totalorder %s23, 1
      %p126 = por %p124, %p125
      %p128 = scmp.ne.s32.totalorder %s111, %s127
      %p129 = scmp.eq.s32.totalorder %s23, 0
      %p130 = por %p128, %p129
      %s131 = ssub.s32 %s24, %s36
      %s132 = ssub.s32 %s25, %s32
      %s133 = sor.u32 %s131, %s132
      %p134 = scmp.eq.s32.totalorder %s133, 0
      %s136 = sadd.s32 %s135, 1
      %s137 = scalar_select %p134, %s135, %s136
      %p140 = pneg %p134
      %p141 = scmp.eq.s32.totalorder %s17, 1
      %p142 = por %p140, %p141
      %p143 = scmp.ne.s32.totalorder %s135, %s138
      %p144 = scmp.eq.s32.totalorder %s17, 0
      %p145 = por %p143, %p144
      %p146 = scmp.ne.s32.totalorder %s135, %s138
      %p147 = scmp.eq.s32.totalorder %s22, 1
      %p148 = por %p146, %p147
      %p149 = scmp.ne.s32.totalorder %s138, %s139
      %p150 = scmp.eq.s32.totalorder %s22, 0
      %p151 = por %p149, %p150
      %p152 = scmp.ne.s32.totalorder %s138, %s139
      %p153 = scmp.eq.s32.totalorder %s23, 1
      %p154 = por %p152, %p153
      %p156 = scmp.ne.s32.totalorder %s139, %s155
      %p157 = scmp.eq.s32.totalorder %s23, 0
      %p158 = por %p156, %p157
      %p159 = scmp.le.s32.totalorder 1, %s17
      %p160 = scmp.lt.s32.totalorder %s17, 3
      %p161 = pnand %p159, %p160
      %p162 = pneg %p161
      // Predicated region
      $region9: #{tpu_custom_call.1} parent=5 // pred_check
        _
      $region10: #{tpu_custom_call.1} parent=5 // pred_check_branch
        %164 = sbr.rel (%p161) target = $region12
      $region11: #{tpu_custom_call.1} parent=5 // pred_region
        %s165 = ssub.s32 %s17, 1
        // Predicated region
        $region13: #{tpu_custom_call.1} parent=11 // pred_check
          %p166 = pneg %p76
        $region14: #{tpu_custom_call.1} parent=11 // pred_check_branch
          %168 = sbr.rel (%p166) target = $region16
        $region15: #{tpu_custom_call.1} parent=11 // pred_region
          %170 = vsyncadd [#allocation7], 0
          %s172 = sshll.u32 %s1, 4
          %s173 = int_to_ptr.hbm [resolvable:$true] %s172
          %s174 = sshll.u32 [#allocation6], 4
          %s175 = int_to_ptr.vmem [resolvable:$true] %s174
          %177 = dma.hbm_to_vmem [thread:$0]  %s173, 16, %s175, [#allocation7]
        $region16: #{tpu_custom_call.1} parent=11 // pred_fallthru
          _
        // Predicated region
        $region17: #{tpu_custom_call.1} parent=11 // pred_check
          %p178 = pneg %p97
        $region18: #{tpu_custom_call.1} parent=11 // pred_check_branch
          %180 = sbr.rel (%p178) target = $region20
        $region19: #{tpu_custom_call.1} parent=11 // pred_region
          _
        $region20: #{tpu_custom_call.1} parent=11 // pred_fallthru
          _
        // Predicated region
        $region21: #{tpu_custom_call.1} parent=11 // pred_check
          %p181 = pneg %p123
        $region22: #{tpu_custom_call.1} parent=11 // pred_check_branch
          %183 = sbr.rel (%p181) target = $region24
        $region23: #{tpu_custom_call.1} parent=11 // pred_region
          %s184 = smul.u32 2, %s27
          %186 = vsyncadd [#allocation7], 0
          %s187 = smul.addr %s184, 4
          %s188 = scalar_lea.hbm %s3, %s187
          %s189 = sshll.u32 %s188, 4
          %s190 = int_to_ptr.hbm [resolvable:$true] %s189
          %s191 = sshll.u32 [#allocation8], 4
          %s192 = int_to_ptr.vmem [resolvable:$true] %s191
          %197 = dma.hbm_to_vmem [thread:$0]  %s190, 1024, %s192, [#allocation7], 128, 128, 8
        $region24: #{tpu_custom_call.1} parent=11 // pred_fallthru
          _
      $region12: #{tpu_custom_call.1} parent=5 // pred_fallthru
        _
      %p198 = scmp.lt.s32.totalorder %s17, 2
      // Predicated region
      $region25: #{tpu_custom_call.1} parent=5 // pred_check
        %p199 = pneg %p198
      $region26: #{tpu_custom_call.1} parent=5 // pred_check_branch
        %201 = sbr.rel (%p199) target = $region28
      $region27: #{tpu_custom_call.1} parent=5 // pred_region
        // Predicated region
        $region29: #{tpu_custom_call.1} parent=27 // pred_check
          %p202 = pneg %p49
        $region30: #{tpu_custom_call.1} parent=27 // pred_check_branch
          %204 = sbr.rel (%p202) target = $region32
        $region31: #{tpu_custom_call.1} parent=27 // pred_region
          %s205 = sand.u32 %s39, 1
          %s206 = scalar_lea.sflag [#allocation4], %s205
          %s207 = sand.u32 %s39, 1
          %s208 = smul.addr %s207, 24
          %s209 = scalar_lea.vmem [#allocation3], %s208
          %s210 = smul.u32 3, %s24
          %212 = vsyncadd %s206, 0
          %s213 = smul.addr %s210, 8
          %s214 = scalar_lea.hbm %s0, %s213
          %s215 = sshll.u32 %s214, 4
          %s216 = int_to_ptr.hbm [resolvable:$true] %s215
          %s217 = sshll.u32 %s209, 4
          %s218 = int_to_ptr.vmem [resolvable:$true] %s217
          %223 = dma.hbm_to_vmem [thread:$0]  %s216, 384, %s218, %s206, 128, 128, 8
        $region32: #{tpu_custom_call.1} parent=27 // pred_fallthru
          _
      $region28: #{tpu_custom_call.1} parent=5 // pred_fallthru
        _
      %p224 = scmp.le.s32.totalorder 1, %s17
      %p225 = scmp.lt.s32.totalorder %s17, 3
      %p226 = pnand %p224, %p225
      %p227 = pneg %p226
      // Predicated region
      $region33: #{tpu_custom_call.1} parent=5 // pred_check
        _
      $region34: #{tpu_custom_call.1} parent=5 // pred_check_branch
        %229 = sbr.rel (%p226) target = $region36
      $region35: #{tpu_custom_call.1} parent=5 // pred_region
        %s230 = ssub.s32 %s17, 1
        %s231 = sand.u32 %s42, 1
        %s232 = scalar_lea.sflag [#allocation4], %s231
        %s233 = sand.u32 %s42, 1
        %s234 = smul.addr %s233, 24
        %s235 = scalar_lea.vmem [#allocation3], %s234
        // Predicated region
        $region37: #{tpu_custom_call.1} parent=35 // pred_check
          %p236 = pneg %p55
        $region38: #{tpu_custom_call.1} parent=35 // pred_check_branch
          %238 = sbr.rel (%p236) target = $region40
        $region39: #{tpu_custom_call.1} parent=35 // pred_region
          %240 = dma.done %s232, 384
        $region40: #{tpu_custom_call.1} parent=35 // pred_fallthru
          _
        // Predicated region
        $region41: #{tpu_custom_call.1} parent=35 // pred_check
          %p241 = pneg %p76
        $region42: #{tpu_custom_call.1} parent=35 // pred_check_branch
          %243 = sbr.rel (%p241) target = $region44
        $region43: #{tpu_custom_call.1} parent=35 // pred_region
          %245 = dma.done [#allocation7], 16
        $region44: #{tpu_custom_call.1} parent=35 // pred_fallthru
          _
        // Predicated region
        $region45: #{tpu_custom_call.1} parent=35 // pred_check
          %p246 = pneg %p123
        $region46: #{tpu_custom_call.1} parent=35 // pred_check_branch
          %248 = sbr.rel (%p246) target = $region48
        $region47: #{tpu_custom_call.1} parent=35 // pred_region
          %250 = dma.done [#allocation7], 1024
        $region48: #{tpu_custom_call.1} parent=35 // pred_fallthru
          _
        %s251 = sand.u32 %s42, 1
        %s252 = scalar_lea.sflag [#allocation4], %s251
        %s253 = sand.u32 %s42, 1
        %s254 = smul.addr %s253, 24
        %s255 = scalar_lea.vmem [#allocation3], %s254
        %p256 = pneg %p55
        %p257 = pneg %p52
        %p258 = pneg %p76
        %p259 = pneg %p73
        %p260 = pneg %p97
        %p261 = pneg %p94
        %p262 = pneg %p123
        %p263 = pneg %p120
        %p264 = pneg %p151
        %p265 = pneg %p148
        %s266 = sand.u32 %s138, 1
        %s267 = scalar_lea.sflag [#allocation5], %s266
        %s268 = sand.u32 %s138, 1
        %s269 = smul.addr %s268, 24
        %s270 = scalar_lea.vmem [#allocation9], %s269
        %s271 = smul.u32 3, %s26
        %s272 = smul.u32 2, %s27
        %s273 = smul.u32 3, %s26
        %s274 = smul.u32 2, %s27
        %p276 = scmp.eq.s32.totalorder %s27, 0
        // Predicated region
        $region49: #{tpu_custom_call.1} parent=35 // pred_check
          %p277 = pneg %p276
        $region50: #{tpu_custom_call.1} parent=35 // pred_check_branch
          %279 = sbr.rel (%p277) target = $region52
        $region51: #{tpu_custom_call.1} parent=35 // pred_region
          %v280 = vld [vmem:[%s235] sm:$0xff]
          %v281 = vld [vmem:[%s235 + $0x8] sm:$0xff]
          %v282 = vld [vmem:[%s235 + $0x10] sm:$0xff]
          %vm283 = vcmask 523264
          %v284 = vsel %vm283, %v280, 0.0
          %285 = vadd.xlane.f32.xlu0 %v284
          %v286 = vpop.xlane.xlu0 %285
          %v287 = vsel %vm283, %v281, 0.0
          %288 = vadd.xlane.f32.xlu0 %v287
          %v289 = vpop.xlane.xlu0 %288
          %v290 = vsel %vm283, %v282, 0.0
          %291 = vadd.xlane.f32.xlu0 %v290
          %v292 = vpop.xlane.xlu0 %291
          %v293 = vrcp.pop 64.0
          %v294 = vmul.f32 64.0, %v293
          %v295 = vsub.f32 1.0, %v294
          %v296 = vmul.f32 %v293, %v295
          %v297 = vadd.f32 %v293, %v296
          %vm298 = vweird.f32 %v293
          %v299 = vsel %vm298, %v293, %v297
          %v300 = vmul.f32 %v286, %v299
          %v301 = vmul.f32 %v289, %v299
          %v302 = vmul.f32 %v292, %v299
          %v303 = vsub.f32 %v280, %v300
          %v304 = vsub.f32 %v281, %v301
          %v305 = vsub.f32 %v282, %v302
          %v306 = vmul.f32 %v303, %v303
          %v307 = vmul.f32 %v304, %v304
          %v308 = vmul.f32 %v305, %v305
          %v309 = vsel %vm283, %v306, 0.0
          %310 = vadd.xlane.f32.xlu0 %v309
          %v311 = vpop.xlane.xlu0 %310
          %v312 = vsel %vm283, %v307, 0.0
          %313 = vadd.xlane.f32.xlu0 %v312
          %v314 = vpop.xlane.xlu0 %313
          %v315 = vsel %vm283, %v308, 0.0
          %316 = vadd.xlane.f32.xlu0 %v315
          %v317 = vpop.xlane.xlu0 %316
          %v318 = vmul.f32 %v311, %v299
          %v319 = vmul.f32 %v314, %v299
          %v320 = vmul.f32 %v317, %v299
          %v321 = vadd.f32 %v318, 1e-05
          %v322 = vadd.f32 %v319, 1e-05
          %v323 = vadd.f32 %v320, 1e-05
          %v324 = vrsqrt.pop %v321
          %v325 = vmul.f32 %v324, %v321
          %v326 = vmul.f32 %v325, %v324
          %v327 = vmul.f32 0.5, %v326
          %v328 = vsub.f32 1.5, %v327
          %v329 = vmul.f32 %v324, %v328
          %vm330 = vweird.f32 %v321
          %vm331 = vweird.f32 %v324
          %vm332 = vmor %vm330, %vm331
          %v333 = vsel %vm332, %v324, %v329
          %v334 = vrsqrt.pop %v322
          %v335 = vmul.f32 %v334, %v322
          %v336 = vmul.f32 %v335, %v334
          %v337 = vmul.f32 0.5, %v336
          %v338 = vsub.f32 1.5, %v337
          %v339 = vmul.f32 %v334, %v338
          %vm340 = vweird.f32 %v322
          %vm341 = vweird.f32 %v334
          %vm342 = vmor %vm340, %vm341
          %v343 = vsel %vm342, %v334, %v339
          %v344 = vrsqrt.pop %v323
          %v345 = vmul.f32 %v344, %v323
          %v346 = vmul.f32 %v345, %v344
          %v347 = vmul.f32 0.5, %v346
          %v348 = vsub.f32 1.5, %v347
          %v349 = vmul.f32 %v344, %v348
          %vm350 = vweird.f32 %v323
          %vm351 = vweird.f32 %v344
          %vm352 = vmor %vm350, %vm351
          %v353 = vsel %vm352, %v344, %v349
          %v354 = vmul.f32 %v303, %v333
          %v355 = vmul.f32 %v304, %v343
          %v356 = vmul.f32 %v305, %v353
          %v357 = vld [vmem:[#allocation6] sm:$0x1]
          %v359 = vperm.slane %v357, 0
          %v361 = vmul.f32 %v354, %v359
          %v362 = vmul.f32 %v355, %v359
          %v363 = vmul.f32 %v356, %v359
          %v364 = vld [vmem:[%s2] sm:$0x1]
          %v366 = vperm.slane %v364, 0
          %v368 = vadd.f32 %v361, %v366
          %v369 = vadd.f32 %v362, %v366
          %v370 = vadd.f32 %v363, %v366
          %v371 = vpack.c.bf16 %v368, %v368
          %v372 = vpack.c.bf16 %v369, %v369
          %v373 = vpack.c.bf16 %v370, %v370
          %vm374 = vcmask 519168
          %375 = vst.msk [vmem:[#allocation2] sm:$0xf] %vm374, %v371
          %376 = vst.msk [vmem:[#allocation2 + $0x4] sm:$0xf] %vm374, %v372
          %377 = vst.msk [vmem:[#allocation2 + $0x8] sm:$0xf] %vm374, %v373
        $region52: #{tpu_custom_call.1} parent=35 // pred_fallthru
          _
        %v378 = vld [vmem:[#allocation2] sm:$0xf]
        %v379 = vld [vmem:[#allocation2 + $0x4] sm:$0xf]
        %v380 = vld [vmem:[#allocation2 + $0x8] sm:$0xf]
        %v381 = vld [vmem:[#allocation8] sm:$0xff]
        %v382 = vld [vmem:[#allocation8 + $0x8] sm:$0xff]
        %v383 = vld [vmem:[#allocation8 + $0x10] sm:$0xff]
        %v384 = vld [vmem:[#allocation8 + $0x18] sm:$0xff]
        %v385 = vld [vmem:[#allocation8 + $0x20] sm:$0xff]
        %v386 = vld [vmem:[#allocation8 + $0x28] sm:$0xff]
        %v387 = vld [vmem:[#allocation8 + $0x30] sm:$0xff]
        %v388 = vld [vmem:[#allocation8 + $0x38] sm:$0xff]
        %v392 = vunpack.c.l.b16 %v378
        %v393 = vunpack.c.l.b16 %v379
        %v394 = vunpack.c.l.b16 %v380
        %v395 = vpack.c.b16 %v393, %v392
        %v396 = vpack.c.b16 %v394, %v394
        %v405 = vunpack.c.l.b16 %v381
        %v406 = vunpack.c.h.b16 %v381
        %v407 = vunpack.c.l.b16 %v382
        %v408 = vunpack.c.h.b16 %v382
        %v409 = vunpack.c.l.b16 %v383
        %v410 = vunpack.c.h.b16 %v383
        %v411 = vunpack.c.l.b16 %v384
        %v412 = vunpack.c.h.b16 %v384
        %v413 = vunpack.c.l.b16 %v385
        %v414 = vunpack.c.h.b16 %v385
        %v415 = vunpack.c.l.b16 %v386
        %v416 = vunpack.c.h.b16 %v386
        %v417 = vunpack.c.l.b16 %v387
        %v418 = vunpack.c.h.b16 %v387
        %v419 = vunpack.c.l.b16 %v388
        %v420 = vunpack.c.h.b16 %v388
        %v421 = vpack.c.b16 %v407, %v405
        %v422 = vpack.c.b16 %v408, %v406
        %v423 = vpack.c.b16 %v411, %v409
        %v424 = vpack.c.b16 %v412, %v410
        %v425 = vpack.c.b16 %v415, %v413
        %v426 = vpack.c.b16 %v416, %v414
        %v427 = vpack.c.b16 %v419, %v417
        %v428 = vpack.c.b16 %v420, %v418
        %vm437 = vcmask 523264
        %v439 = vsel %vm437, %v395, 0
        %v442 = vsel %vm437, %v396, 0
        %444 = vmatpush.bf16.msra.mxu0 0
        %445 = vmatpush.bf16.msra.mxu0 0
        %446 = vmatpush.bf16.msra.mxu0 0
        %447 = vmatpush.bf16.msra.mxu0 0
        %448 = vmatpush.bf16.msra.mxu0 %v427
        %449 = vmatpush.bf16.msra.mxu0 %v425
        %450 = vmatpush.bf16.msra.mxu0 %v423
        %451 = vmatpush.bf16.msra.mxu0 %v421
        %452 = vmatmul.bf16.gmra.mxu0 %v439
        %v453 = vpop.f32.mrf.mxu0
        %v454 = vadd.f32 0.0, %v453
        %v455 = vpop.f32.mrf.mxu0
        %v456 = vadd.f32 0.0, %v455
        %457 = vmatmul.bf16.gmra.mxu0 %v442
        %v458 = vpop.f32.mrf.mxu0
        %v459 = vadd.f32 0.0, %v458
        %v460 = vpop.f32.mrf.mxu0
        %461 = vdwg.mxu0
        %462 = vmatpush.bf16.msra.mxu0 0
        %463 = vmatpush.bf16.msra.mxu0 0
        %464 = vmatpush.bf16.msra.mxu0 0
        %465 = vmatpush.bf16.msra.mxu0 0
        %466 = vmatpush.bf16.msra.mxu0 %v428
        %467 = vmatpush.bf16.msra.mxu0 %v426
        %468 = vmatpush.bf16.msra.mxu0 %v424
        %469 = vmatpush.bf16.msra.mxu0 %v422
        %470 = vmatmul.bf16.gmra.mxu0 %v439
        %v471 = vpop.f32.mrf.mxu0
        %v472 = vadd.f32 0.0, %v471
        %v473 = vpop.f32.mrf.mxu0
        %v474 = vadd.f32 0.0, %v473
        %475 = vmatmul.bf16.gmra.mxu0 %v442
        %v476 = vpop.f32.mrf.mxu0
        %v477 = vadd.f32 0.0, %v476
        %v478 = vpop.f32.mrf.mxu0
        %479 = vdwg.mxu0
        %v480 = vpack.c.bf16 %v472, %v454
        %v481 = vpack.c.bf16 %v474, %v456
        %v482 = vpack.c.bf16 %v477, %v459
        %vm483 = vcmask 1043456
        %vm484 = vcmask 523268
        %vm485 = vmor %vm484, %vm483
        %486 = vst.msk [vmem:[%s270] sm:$0xff] %vm485, %v480
        %487 = vst.msk [vmem:[%s270 + $0x8] sm:$0xff] %vm485, %v481
        %488 = vst.msk [vmem:[%s270 + $0x10] sm:$0xff] %vm485, %v482
        %s489 = sand.u32 %s138, 1
        %s490 = scalar_lea.sflag [#allocation5], %s489
        %s491 = sand.u32 %s138, 1
        %s492 = smul.addr %s491, 24
        %s493 = scalar_lea.vmem [#allocation9], %s492
        // Predicated region
        $region53: #{tpu_custom_call.1} parent=35 // pred_check
          %p494 = pneg %p148
        $region54: #{tpu_custom_call.1} parent=35 // pred_check_branch
          %496 = sbr.rel (%p494) target = $region56
        $region55: #{tpu_custom_call.1} parent=35 // pred_region
          %s497 = smul.u32 3, %s26
          %s498 = smul.u32 2, %s27
          %500 = vsyncadd %s490, 0
          %s501 = smul.addr %s497, 2
          %s502 = sadd.s32 %s498, %s501
          %s503 = smul.addr %s502, 4
          %s504 = scalar_lea.hbm %s4, %s503
          %s505 = sshll.u32 %s493, 4
          %s506 = int_to_ptr.vmem [resolvable:$true] %s505
          %s507 = sshll.u32 %s504, 4
          %s508 = int_to_ptr.hbm [resolvable:$true] %s507
          %513 = dma.vmem_to_hbm [thread:$0]  %s506, 384, %s508, %s490, 128, 128, 8
        $region56: #{tpu_custom_call.1} parent=35 // pred_fallthru
          _
      $region36: #{tpu_custom_call.1} parent=5 // pred_fallthru
        _
      %p514 = scmp.le.s32.totalorder 2, %s17
      // Predicated region
      $region57: #{tpu_custom_call.1} parent=5 // pred_check
        %p515 = pneg %p514
      $region58: #{tpu_custom_call.1} parent=5 // pred_check_branch
        %517 = sbr.rel (%p515) target = $region60
      $region59: #{tpu_custom_call.1} parent=5 // pred_region
        %s518 = ssub.s32 %s17, 2
        // Predicated region
        $region61: #{tpu_custom_call.1} parent=59 // pred_check
          %p519 = pneg %p154
        $region62: #{tpu_custom_call.1} parent=59 // pred_check_branch
          %521 = sbr.rel (%p519) target = $region64
        $region63: #{tpu_custom_call.1} parent=59 // pred_region
          %s522 = sand.u32 %s139, 1
          %s523 = scalar_lea.sflag [#allocation5], %s522
          %s524 = sand.u32 %s139, 1
          %s525 = smul.addr %s524, 24
          %s526 = scalar_lea.vmem [#allocation9], %s525
          %528 = dma.done %s523, 384
        $region64: #{tpu_custom_call.1} parent=59 // pred_fallthru
          _
      $region60: #{tpu_custom_call.1} parent=5 // pred_fallthru
        _
    $region6: #{tpu_custom_call.1} parent=1 // loop_footer
      %s21 = sadd.s32 1, %s17
    $region7: #{tpu_custom_call.1} parent=1 // loop_footer_branch
      %16 = sbr.rel target = $region3
    $region8: #{tpu_custom_call.1} parent=1 // loop_exit
      _
    %529 = vsyncpa [#allocation4], 1
    %s530 = scalar_lea.sflag [#allocation4], 1
    %531 = vsyncpa %s530, 1
    %532 = vsyncpa [#allocation7], 1
    %533 = vsyncpa [#allocation5], 1
    %s534 = scalar_lea.sflag [#allocation5], 1
    %535 = vsyncpa %s534, 1

</llo_original>
